<compile_context>
chip_gen: v6e
topology: v6e:2x2x1
jax: 0.10.0
libtpu: 0.0.40
codegen_flags: <defaults>
</compile_context>

<pallas_src>
import jax
import jax.numpy as jnp
from jax.experimental import pallas as pl
from jax.experimental.pallas import tpu as pltpu

_LANE = 128          # lane width: all out-dims padded to a multiple of this
_BF16_SUBLANE = 16   # bf16 sublane tile: row offsets in the slab stay aligned


def _round_up(n, m):
    return ((n + m - 1) // m) * m


def _actor_kernel(x_ref, w_ref, b_ref, o_ref):
    """Fused 3-layer MLP.

    x_ref: (B, states) f32
    w_ref: (states_pad + 2*Hpad, Hpad) bf16 — rows [0:states) = W1.T,
           rows [states_pad : states_pad+Hpad) = W2.T (zero-padded),
           rows [states_pad+Hpad : states_pad+2*Hpad) = W3.T (zero-padded).
    b_ref: (4, Hpad) f32 — rows 0..2 = b1,b2,b3 (zero-padded),
           row 3 = max_q_action broadcast across all lanes.
    o_ref: (B, Hpad) f32 — first `actions` lanes valid, rest = max_q_action.
    """
    states = x_ref.shape[1]
    hpad = w_ref.shape[1]
    states_pad = w_ref.shape[0] - 2 * hpad

    # One vld for all biases + the max_q row; value slices are cheap.
    b_all = b_ref[...]                 # (4, Hpad) f32
    b1 = b_all[0:1, :]
    b2 = b_all[1:2, :]
    b3 = b_all[2:3, :]
    maxq = b_all[3:4, :]

    x_bf = x_ref[...].astype(jnp.bfloat16)

    # Layer 1: Linear + ReLU   (bf16 MXU inputs, f32 accumulate / elementwise)
    w1 = w_ref[0:states, :]
    h1 = jnp.dot(x_bf, w1, preferred_element_type=jnp.float32)
    h1 = jnp.maximum(h1 + b1, 0.0)

    # Layer 2: Linear + ReLU
    w2 = w_ref[states_pad:states_pad + hpad, :]
    h2 = jnp.dot(h1.astype(jnp.bfloat16), w2, preferred_element_type=jnp.float32)
    h2 = jnp.maximum(h2 + b2, 0.0)

    # Layer 3: Linear + tanh + max_q_action offset (lane-padded output)
    w3 = w_ref[states_pad + hpad:states_pad + 2 * hpad, :]
    h3 = jnp.dot(h2.astype(jnp.bfloat16), w3, preferred_element_type=jnp.float32)
    o_ref[...] = (jnp.tanh(h3 + b3) + maxq).astype(o_ref.dtype)


@jax.jit
def actor_forward(x, params):
    """x: (B, states) f32. params: packed-slab dict from init_actor_params.

    Returns the lane-padded (B, Hpad) f32 output; the first `actions` lanes
    are the actor's actions, padded lanes hold max_q_action.
    """
    w_slab = params["w"]
    b_slab = params["b"]
    B = x.shape[0]
    hpad = w_slab.shape[1]

    vmem = pl.BlockSpec(memory_space=pltpu.MemorySpace.VMEM)

    return pl.pallas_call(
        _actor_kernel,
        out_shape=jax.ShapeDtypeStruct((B, hpad), jnp.float32),
        in_specs=[vmem, vmem, vmem],
        out_specs=vmem,
    )(x, w_slab, b_slab)


def update_max_q_action(kernel_params, max_q_action):
    """Cheap device-side update of the folded max_q row; no recompile."""
    b = kernel_params["b"].at[3, :].set(jnp.float32(max_q_action))
    return dict(kernel_params, b=b)


def init_actor_params(key, states, actions, hidden_size_1, hidden_size_2,
                      max_q_action):
    """nn.Linear-style U(-1/sqrt(fan_in), 1/sqrt(fan_in)) init.

    Returns (kernel_params, ref_params):
      kernel_params: {"w": packed bf16 weight slab, "b": packed f32 bias slab}
      ref_params:    torch-layout f32 weights/biases for a pure-JAX reference.
    """
    ks = jax.random.split(key, 6)

    def lin(kw, kb, fan_in, fan_out):
        bound = 1.0 / jnp.sqrt(fan_in)
        w = jax.random.uniform(kw, (fan_out, fan_in), jnp.float32, -bound, bound)
        b = jax.random.uniform(kb, (fan_out,), jnp.float32, -bound, bound)
        return w, b

    w1, b1 = lin(ks[0], ks[1], states, hidden_size_1)
    w2, b2 = lin(ks[2], ks[3], hidden_size_1, hidden_size_2)
    w3, b3 = lin(ks[4], ks[5], hidden_size_2, actions)

    ref_params = {"w1": w1, "b1": b1, "w2": w2, "b2": b2, "w3": w3, "b3": b3}

    # Packed, lane-dense kernel layout.
    hpad = _round_up(max(hidden_size_1, hidden_size_2, actions), _LANE)
    states_pad = _round_up(states, _BF16_SUBLANE)
    # TODO(synk): hpad > 128 would want per-layer tiling instead of one slab.

    w_slab = jnp.zeros((states_pad + 2 * hpad, hpad), jnp.float32)
    w_slab = w_slab.at[:states, :hidden_size_1].set(w1.T)
    w_slab = w_slab.at[states_pad:states_pad + hidden_size_1,
                       :hidden_size_2].set(w2.T)
    w_slab = w_slab.at[states_pad + hpad:states_pad + hpad + hidden_size_2,
                       :actions].set(w3.T)
    w_slab = w_slab.astype(jnp.bfloat16)

    b_slab = jnp.zeros((4, hpad), jnp.float32)
    b_slab = b_slab.at[0, :hidden_size_1].set(b1)
    b_slab = b_slab.at[1, :hidden_size_2].set(b2)
    b_slab = b_slab.at[2, :actions].set(b3)
    b_slab = b_slab.at[3, :].set(jnp.float32(max_q_action))

    kernel_params = {"w": w_slab, "b": b_slab}
    return kernel_params, ref_params


if __name__ == "__main__":
    # Small shapes consistent with the module's MLP forward.
    batch = 16          # multiple of 16: keeps the bf16 MXU LHS vreg full
    states = 16
    actions = 8
    hidden_size_1 = 32
    hidden_size_2 = 32
    max_q_action = 2.0

    key = jax.random.PRNGKey(0)
    k_x, k_p = jax.random.split(key)
    x = jax.random.normal(k_x, (batch, states), dtype=jnp.float32)
    kparams, rparams = init_actor_params(
        k_p, states, actions, hidden_size_1, hidden_size_2, max_q_action)

    out_pad = jax.block_until_ready(actor_forward(x, kparams))

    # Changing max_q_action rebuilds only the bias slab (same shapes -> no
    # Mosaic recompile of the pallas_call).
    kparams2 = update_max_q_action(kparams, max_q_action + 1.0)
    out_pad2 = jax.block_until_ready(actor_forward(x, kparams2))

    # Pure-JAX f32 reference (torch layout). bf16 matmul inputs -> loosen tol.
    h1 = jnp.maximum(x @ rparams["w1"].T + rparams["b1"], 0.0)
    h2 = jnp.maximum(h1 @ rparams["w2"].T + rparams["b2"], 0.0)
    ref = jnp.tanh(h2 @ rparams["w3"].T + rparams["b3"]) + max_q_action

    out = out_pad[:, :actions]      # valid lanes; padded lanes hold max_q
    out2 = out_pad2[:, :actions]

    assert out_pad.shape == (batch, 128)
    assert out.shape == (batch, actions)
    assert jnp.allclose(out, ref, atol=3e-2, rtol=3e-2)
    assert jnp.allclose(out2, ref + 1.0, atol=3e-2, rtol=3e-2)

    print("KERNEL_OK")
</pallas_src>

<mosaic_0001>
module attributes {stable_mosaic.version = 11 : i64} {
  func.func @_actor_kernel(%arg0: memref<16x16xf32, #tpu.memory_space<vmem>>, %arg1: memref<272x128xbf16, #tpu.memory_space<vmem>>, %arg2: memref<4x128xf32, #tpu.memory_space<vmem>>, %arg3: memref<16x128xf32, #tpu.memory_space<vmem>>) attributes {dimension_semantics = [], scalar_prefetch = 0 : i64, scratch_operands = 0 : i64, tpu.core_type = #tpu.core_type<tc>} {
    %c0 = arith.constant 0 : index
    %c0_0 = arith.constant 0 : index
    %0 = vector.load %arg2[%c0, %c0_0] : memref<4x128xf32, #tpu.memory_space<vmem>>, vector<4x128xf32>
    %1 = vector.extract_strided_slice %0 {offsets = [0, 0], sizes = [1, 128], strides = [1, 1]} : vector<4x128xf32> to vector<1x128xf32>
    %2 = vector.extract_strided_slice %0 {offsets = [1, 0], sizes = [1, 128], strides = [1, 1]} : vector<4x128xf32> to vector<1x128xf32>
    %3 = vector.extract_strided_slice %0 {offsets = [2, 0], sizes = [1, 128], strides = [1, 1]} : vector<4x128xf32> to vector<1x128xf32>
    %4 = vector.extract_strided_slice %0 {offsets = [3, 0], sizes = [1, 128], strides = [1, 1]} : vector<4x128xf32> to vector<1x128xf32>
    %c0_1 = arith.constant 0 : index
    %c0_2 = arith.constant 0 : index
    %5 = vector.load %arg0[%c0_1, %c0_2] : memref<16x16xf32, #tpu.memory_space<vmem>>, vector<16x16xf32>
    %6 = arith.truncf %5 : vector<16x16xf32> to vector<16x16xbf16>
    %c0_3 = arith.constant 0 : index
    %c0_4 = arith.constant 0 : index
    %7 = vector.load %arg1[%c0_3, %c0_4] : memref<272x128xbf16, #tpu.memory_space<vmem>>, vector<16x128xbf16>
    %cst = arith.constant dense<0.000000e+00> : vector<16x128xf32>
    %8 = tpu.matmul %6, %7, %cst {dimension_numbers = #tpu.dot_dimension_numbers<[1], [0], [0], [1], [0, 0, 1, 1], [], []>} : vector<16x16xbf16>, vector<16x128xbf16>, vector<16x128xf32> -> vector<16x128xf32>
    %9 = vector.broadcast %1 : vector<1x128xf32> to vector<16x128xf32>
    %10 = arith.addf %8, %9 : vector<16x128xf32>
    %cst_5 = arith.constant 0.000000e+00 : f32
    %11 = vector.broadcast %cst_5 : f32 to vector<16x128xf32>
    %12 = arith.maximumf %10, %11 : vector<16x128xf32>
    %c16 = arith.constant 16 : index
    %c0_6 = arith.constant 0 : index
    %13 = vector.load %arg1[%c16, %c0_6] : memref<272x128xbf16, #tpu.memory_space<vmem>>, vector<128x128xbf16>
    %14 = arith.truncf %12 : vector<16x128xf32> to vector<16x128xbf16>
    %cst_7 = arith.constant dense<0.000000e+00> : vector<16x128xf32>
    %15 = tpu.matmul %14, %13, %cst_7 {dimension_numbers = #tpu.dot_dimension_numbers<[1], [0], [0], [1], [0, 0, 1, 1], [], []>} : vector<16x128xbf16>, vector<128x128xbf16>, vector<16x128xf32> -> vector<16x128xf32>
    %16 = vector.broadcast %2 : vector<1x128xf32> to vector<16x128xf32>
    %17 = arith.addf %15, %16 : vector<16x128xf32>
    %cst_8 = arith.constant 0.000000e+00 : f32
    %18 = vector.broadcast %cst_8 : f32 to vector<16x128xf32>
    %19 = arith.maximumf %17, %18 : vector<16x128xf32>
    %c144 = arith.constant 144 : index
    %c0_9 = arith.constant 0 : index
    %20 = vector.load %arg1[%c144, %c0_9] : memref<272x128xbf16, #tpu.memory_space<vmem>>, vector<128x128xbf16>
    %21 = arith.truncf %19 : vector<16x128xf32> to vector<16x128xbf16>
    %cst_10 = arith.constant dense<0.000000e+00> : vector<16x128xf32>
    %22 = tpu.matmul %21, %20, %cst_10 {dimension_numbers = #tpu.dot_dimension_numbers<[1], [0], [0], [1], [0, 0, 1, 1], [], []>} : vector<16x128xbf16>, vector<128x128xbf16>, vector<16x128xf32> -> vector<16x128xf32>
    %23 = vector.broadcast %3 : vector<1x128xf32> to vector<16x128xf32>
    %24 = arith.addf %22, %23 : vector<16x128xf32>
    %25 = math.tanh %24 : vector<16x128xf32>
    %26 = vector.broadcast %4 : vector<1x128xf32> to vector<16x128xf32>
    %27 = arith.addf %25, %26 : vector<16x128xf32>
    %c0_11 = arith.constant 0 : index
    %c0_12 = arith.constant 0 : index
    %28 = vector.load %arg3[%c0_11, %c0_12] : memref<16x128xf32, #tpu.memory_space<vmem>>, vector<16x128xf32>
    tpu.vector_store %arg3[%c0_11, %c0_12], %27 {strides = array<i32>} : memref<16x128xf32, #tpu.memory_space<vmem>>, vector<16x128xf32>,
    return
  }
}

</mosaic_0001>

<llo_original>
// kernel: actor_forward.1
$region0: #{actor_forward.1}
  #allocation0 [shape = 'u32[]', space=smem, size = 0x4, offset = 0x4, fixed_abs, tag = 'smem constant byte address 0x4 - core index']
  #allocation1 [shape = 'u32[144,128]{1,0:T(1,128)}', space=vmem, size = 0x12000, scoped, tag = 'internal scratch']
  %s0 = inlined_call_operand.hbm [shape: f32[16,16], index: 0, kind: input, shape index: {}]
  %s1 = inlined_call_operand.hbm [shape: bf16[272,128], index: 1, kind: input, shape index: {}]
  %s2 = inlined_call_operand.hbm [shape: f32[4,128], index: 2, kind: input, shape index: {}]
  %s3 = inlined_call_operand.hbm [shape: f32[16,128], index: 3, kind: output, shape index: {}]
  %s4 = sld [smem:[#allocation0]]
  $region34: #{actor_forward.1} parent=0
    _
  %s6 = ssub.s32 1, %s4
  %s7 = scalar_select 0, %s6, %s4
  $region1: #{actor_forward.1} parent=0
    #allocation2 [shape = 'u8[8192]{0}', space=vmem, size = 0x2000, scoped, tag = 'input window, operand 0, single buffered']
    #allocation3 [shape = 's32[1]{0}', space=sflag, size = 0x4, scoped, tag = 'scoped memory for actor_forward.1']
    #allocation4 [shape = 's32[1]{0}', space=sflag, size = 0x4, scoped, tag = 'scoped memory for actor_forward.1']
    #allocation5 [shape = 'u8[69632]{0}', space=vmem, size = 0x11000, scoped, tag = 'input window, operand 1, single buffered']
    #allocation6 [shape = 's32[1]{0}', space=sflag, size = 0x4, scoped, tag = 'scoped memory for actor_forward.1']
    #allocation7 [shape = 'u8[2048]{0}', space=vmem, size = 0x800, scoped, tag = 'input window, operand 2, single buffered']
    #allocation8 [shape = 'u8[8192]{0}', space=vmem, size = 0x2000, scoped, tag = 'output window, operand 0, single buffered']
    %8 = vsyncpa [#allocation3], 0
    %9 = vsyncpa [#allocation6], 0
    %10 = vsyncpa [#allocation4], 0
    // Predicated region
    $region2: #{actor_forward.1} parent=1 // pred_check
      _
    $region3: #{actor_forward.1} parent=1 // pred_check_branch
      %12 = sbr.rel (0) target = $region5
    $region4: #{actor_forward.1} parent=1 // pred_region
      %s14 = ssub.s32 256, 256
      %15 = vsyncadd [#allocation3], %s14
      %s16 = sshll.u32 [#allocation2], 4
      %s17 = int_to_ptr.vmem [resolvable:$true] %s16
      %22 = dma.hbm_to_vmem [thread:$0]  %s0, 256, %s17, [#allocation3], 128, 128, 8
    $region5: #{actor_forward.1} parent=1 // pred_fallthru
      _
    // Predicated region
    $region6: #{actor_forward.1} parent=1 // pred_check
      _
    $region7: #{actor_forward.1} parent=1 // pred_check_branch
      %24 = sbr.rel (0) target = $region9
    $region8: #{actor_forward.1} parent=1 // pred_region
      %s26 = ssub.s32 2176, 2176
      %27 = vsyncadd [#allocation6], %s26
      %s28 = sshll.u32 [#allocation5], 4
      %s29 = int_to_ptr.vmem [resolvable:$true] %s28
      %34 = dma.hbm_to_vmem [thread:$0]  %s1, 2176, %s29, [#allocation6], 64, 64, 4
    $region9: #{actor_forward.1} parent=1 // pred_fallthru
      _
    // Predicated region
    $region10: #{actor_forward.1} parent=1 // pred_check
      _
    $region11: #{actor_forward.1} parent=1 // pred_check_branch
      %36 = sbr.rel (0) target = $region13
    $region12: #{actor_forward.1} parent=1 // pred_region
      %s38 = ssub.s32 64, 64
      %39 = vsyncadd [#allocation6], %s38
      %s41 = sshll.u32 [#allocation7], 4
      %s42 = int_to_ptr.vmem [resolvable:$true] %s41
      %44 = dma.hbm_to_vmem [thread:$0]  %s2, 64, %s42, [#allocation6]
    $region13: #{actor_forward.1} parent=1 // pred_fallthru
      _
    // Predicated region
    $region14: #{actor_forward.1} parent=1 // pred_check
      _
    $region15: #{actor_forward.1} parent=1 // pred_check_branch
      %46 = sbr.rel (0) target = $region17
    $region16: #{actor_forward.1} parent=1 // pred_region
      %47 = dma.done [#allocation3], 256
    $region17: #{actor_forward.1} parent=1 // pred_fallthru
      _
    // Predicated region
    $region18: #{actor_forward.1} parent=1 // pred_check
      _
    $region19: #{actor_forward.1} parent=1 // pred_check_branch
      %49 = sbr.rel (0) target = $region21
    $region20: #{actor_forward.1} parent=1 // pred_region
      %50 = dma.done [#allocation6], 2176
    $region21: #{actor_forward.1} parent=1 // pred_fallthru
      _
    // Predicated region
    $region22: #{actor_forward.1} parent=1 // pred_check
      _
    $region23: #{actor_forward.1} parent=1 // pred_check_branch
      %52 = sbr.rel (0) target = $region25
    $region24: #{actor_forward.1} parent=1 // pred_region
      %53 = dma.done [#allocation6], 64
    $region25: #{actor_forward.1} parent=1 // pred_fallthru
      _
    %v55 = vld [vmem:[#allocation7] sm:$0xf]
    %v56 = vld [vmem:[#allocation2] sm:$0xff]
    %v57 = vld [vmem:[#allocation2 + $0x8] sm:$0xff]
    %v58 = vpack.c.bf16 %v57, %v56
    %v59 = vld [vmem:[#allocation5] sm:$0xf]
    %v60 = vld [vmem:[#allocation5 + $0x4] sm:$0xf]
    %v61 = vlaneseq
    %v62 = vshrl.u32 %v61, 7
    %v63 = vsub.s32 0, %v62
    %v64 = vrot.slane %v55, %v63
    %v67 = vunpack.c.l.b16 %v59
    %v68 = vunpack.c.l.b16 %v60
    %v69 = vpack.c.b16 %v68, %v67
    %vm71 = vcmask 130048
    %v73 = vsel %vm71, %v58, 0
    %75 = vmatprep.subr.bf16.mxu0 0
    %76 = vmatpush1.bf16.msra.mxu0 0
    %77 = vmatprep.subr.bf16.mxu0 0
    %78 = vmatpush1.bf16.msra.mxu0 0
    %79 = vmatprep.subr.bf16.mxu0 0
    %80 = vmatpush1.bf16.msra.mxu0 0
    %81 = vmatprep.subr.bf16.mxu0 0
    %82 = vmatpush1.bf16.msra.mxu0 0
    %83 = vmatprep.subr.bf16.mxu0 0
    %84 = vmatpush1.bf16.msra.mxu0 0
    %85 = vmatprep.subr.bf16.mxu0 0
    %86 = vmatpush1.bf16.msra.mxu0 0
    %87 = vmatprep.subr.bf16.mxu0 0
    %88 = vmatpush1.bf16.msra.mxu0 0
    %89 = vmatprep.subr.bf16.mxu0 0
    %90 = vmatpush1.bf16.msra.mxu0 %v69
    %91 = vmatprep.subr.bf16.mxu0 0
    %92 = vmatpush2.bf16.msra.mxu0 0
    %93 = vmatprep.subr.bf16.mxu0 0
    %94 = vmatpush2.bf16.msra.mxu0 0
    %95 = vmatprep.subr.bf16.mxu0 0
    %96 = vmatpush2.bf16.msra.mxu0 0
    %97 = vmatprep.subr.bf16.mxu0 0
    %98 = vmatpush2.bf16.msra.mxu0 0
    %99 = vmatprep.subr.bf16.mxu0 0
    %100 = vmatpush2.bf16.msra.mxu0 0
    %101 = vmatprep.subr.bf16.mxu0 0
    %102 = vmatpush2.bf16.msra.mxu0 0
    %103 = vmatprep.subr.bf16.mxu0 0
    %104 = vmatpush2.bf16.msra.mxu0 0
    %105 = vmatprep.subr.bf16.mxu0 0
    %106 = vmatpush2.bf16.msra.mxu0 0
    %107 = vmatprep.mubr.bf16.mxu0 0
    %108 = vmatmul.mubr.bf16.gmra.mxu0 %v73
    %v109 = vpop.f32.mrf.mxu0
    %v110 = vadd.f32 %v64, %v109
    %v111 = vpop.f32.mrf.mxu0
    %v112 = vpop.f32.mrf.mxu0
    %v113 = vadd.f32 %v64, %v112
    %v114 = vpop.f32.mrf.mxu0
    %115 = vdwg.mxu0
    %v116 = vmax.f32 %v110, 0.0
    %v117 = vmax.f32 %v113, 0.0
    %v118 = vld [vmem:[#allocation5 + $0x8] sm:$0xf]
    %v119 = vld [vmem:[#allocation5 + $0xc] sm:$0xf]
    %v120 = vld [vmem:[#allocation5 + $0x10] sm:$0xf]
    %v121 = vld [vmem:[#allocation5 + $0x14] sm:$0xf]
    %v122 = vld [vmem:[#allocation5 + $0x18] sm:$0xf]
    %v123 = vld [vmem:[#allocation5 + $0x1c] sm:$0xf]
    %v124 = vld [vmem:[#allocation5 + $0x20] sm:$0xf]
    %v125 = vld [vmem:[#allocation5 + $0x24] sm:$0xf]
    %v126 = vld [vmem:[#allocation5 + $0x28] sm:$0xf]
    %v127 = vld [vmem:[#allocation5 + $0x2c] sm:$0xf]
    %v128 = vld [vmem:[#allocation5 + $0x30] sm:$0xf]
    %v129 = vld [vmem:[#allocation5 + $0x34] sm:$0xf]
    %v130 = vld [vmem:[#allocation5 + $0x38] sm:$0xf]
    %v131 = vld [vmem:[#allocation5 + $0x3c] sm:$0xf]
    %v132 = vld [vmem:[#allocation5 + $0x40] sm:$0xf]
    %v133 = vld [vmem:[#allocation5 + $0x44] sm:$0xf]
    %v134 = vpack.c.bf16 %v117, %v116
    %v135 = vlaneseq
    %v136 = vshrl.u32 %v135, 7
    %v137 = vsub.s32 1, %v136
    %v138 = vrot.slane %v55, %v137
    %v155 = vunpack.c.l.b16 %v118
    %v156 = vunpack.c.l.b16 %v119
    %v157 = vunpack.c.l.b16 %v120
    %v158 = vunpack.c.l.b16 %v121
    %v159 = vunpack.c.l.b16 %v122
    %v160 = vunpack.c.l.b16 %v123
    %v161 = vunpack.c.l.b16 %v124
    %v162 = vunpack.c.l.b16 %v125
    %v163 = vunpack.c.l.b16 %v126
    %v164 = vunpack.c.l.b16 %v127
    %v165 = vunpack.c.l.b16 %v128
    %v166 = vunpack.c.l.b16 %v129
    %v167 = vunpack.c.l.b16 %v130
    %v168 = vunpack.c.l.b16 %v131
    %v169 = vunpack.c.l.b16 %v132
    %v170 = vunpack.c.l.b16 %v133
    %v171 = vpack.c.b16 %v156, %v155
    %v172 = vpack.c.b16 %v158, %v157
    %v173 = vpack.c.b16 %v160, %v159
    %v174 = vpack.c.b16 %v162, %v161
    %v175 = vpack.c.b16 %v164, %v163
    %v176 = vpack.c.b16 %v166, %v165
    %v177 = vpack.c.b16 %v168, %v167
    %v178 = vpack.c.b16 %v170, %v169
    %187 = vmatprep.subr.bf16.mxu0 0
    %188 = vmatpush1.bf16.msra.mxu0 %v178
    %189 = vmatprep.subr.bf16.mxu0 0
    %190 = vmatpush1.bf16.msra.mxu0 %v177
    %191 = vmatprep.subr.bf16.mxu0 0
    %192 = vmatpush1.bf16.msra.mxu0 %v176
    %193 = vmatprep.subr.bf16.mxu0 0
    %194 = vmatpush1.bf16.msra.mxu0 %v175
    %195 = vmatprep.subr.bf16.mxu0 0
    %196 = vmatpush1.bf16.msra.mxu0 %v174
    %197 = vmatprep.subr.bf16.mxu0 0
    %198 = vmatpush1.bf16.msra.mxu0 %v173
    %199 = vmatprep.subr.bf16.mxu0 0
    %200 = vmatpush1.bf16.msra.mxu0 %v172
    %201 = vmatprep.subr.bf16.mxu0 0
    %202 = vmatpush1.bf16.msra.mxu0 %v171
    %203 = vmatprep.subr.bf16.mxu0 0
    %204 = vmatpush2.bf16.msra.mxu0 0
    %205 = vmatprep.subr.bf16.mxu0 0
    %206 = vmatpush2.bf16.msra.mxu0 0
    %207 = vmatprep.subr.bf16.mxu0 0
    %208 = vmatpush2.bf16.msra.mxu0 0
    %209 = vmatprep.subr.bf16.mxu0 0
    %210 = vmatpush2.bf16.msra.mxu0 0
    %211 = vmatprep.subr.bf16.mxu0 0
    %212 = vmatpush2.bf16.msra.mxu0 0
    %213 = vmatprep.subr.bf16.mxu0 0
    %214 = vmatpush2.bf16.msra.mxu0 0
    %215 = vmatprep.subr.bf16.mxu0 0
    %216 = vmatpush2.bf16.msra.mxu0 0
    %217 = vmatprep.subr.bf16.mxu0 0
    %218 = vmatpush2.bf16.msra.mxu0 0
    %219 = vmatprep.mubr.bf16.mxu0 0
    %220 = vmatmul.mubr.bf16.gmra.mxu0 %v134
    %v221 = vpop.f32.mrf.mxu0
    %v222 = vadd.f32 %v138, %v221
    %v223 = vpop.f32.mrf.mxu0
    %v224 = vpop.f32.mrf.mxu0
    %v225 = vadd.f32 %v138, %v224
    %v226 = vpop.f32.mrf.mxu0
    %227 = vdwg.mxu0
    %v228 = vmax.f32 %v222, 0.0
    %v229 = vmax.f32 %v225, 0.0
    %v230 = vld [vmem:[#allocation5 + $0x48] sm:$0xf]
    %v231 = vld [vmem:[#allocation5 + $0x4c] sm:$0xf]
    %v232 = vld [vmem:[#allocation5 + $0x50] sm:$0xf]
    %v233 = vld [vmem:[#allocation5 + $0x54] sm:$0xf]
    %v234 = vld [vmem:[#allocation5 + $0x58] sm:$0xf]
    %v235 = vld [vmem:[#allocation5 + $0x5c] sm:$0xf]
    %v236 = vld [vmem:[#allocation5 + $0x60] sm:$0xf]
    %v237 = vld [vmem:[#allocation5 + $0x64] sm:$0xf]
    %v238 = vld [vmem:[#allocation5 + $0x68] sm:$0xf]
    %v239 = vld [vmem:[#allocation5 + $0x6c] sm:$0xf]
    %v240 = vld [vmem:[#allocation5 + $0x70] sm:$0xf]
    %v241 = vld [vmem:[#allocation5 + $0x74] sm:$0xf]
    %v242 = vld [vmem:[#allocation5 + $0x78] sm:$0xf]
    %v243 = vld [vmem:[#allocation5 + $0x7c] sm:$0xf]
    %v244 = vld [vmem:[#allocation5 + $0x80] sm:$0xf]
    %v245 = vld [vmem:[#allocation5 + $0x84] sm:$0xf]
    %v246 = vpack.c.bf16 %v229, %v228
    %v247 = vlaneseq
    %v248 = vshrl.u32 %v247, 7
    %v249 = vsub.s32 2, %v248
    %v250 = vrot.slane %v55, %v249
    %v267 = vunpack.c.l.b16 %v230
    %v268 = vunpack.c.l.b16 %v231
    %v269 = vunpack.c.l.b16 %v232
    %v270 = vunpack.c.l.b16 %v233
    %v271 = vunpack.c.l.b16 %v234
    %v272 = vunpack.c.l.b16 %v235
    %v273 = vunpack.c.l.b16 %v236
    %v274 = vunpack.c.l.b16 %v237
    %v275 = vunpack.c.l.b16 %v238
    %v276 = vunpack.c.l.b16 %v239
    %v277 = vunpack.c.l.b16 %v240
    %v278 = vunpack.c.l.b16 %v241
    %v279 = vunpack.c.l.b16 %v242
    %v280 = vunpack.c.l.b16 %v243
    %v281 = vunpack.c.l.b16 %v244
    %v282 = vunpack.c.l.b16 %v245
    %v283 = vpack.c.b16 %v268, %v267
    %v284 = vpack.c.b16 %v270, %v269
    %v285 = vpack.c.b16 %v272, %v271
    %v286 = vpack.c.b16 %v274, %v273
    %v287 = vpack.c.b16 %v276, %v275
    %v288 = vpack.c.b16 %v278, %v277
    %v289 = vpack.c.b16 %v280, %v279
    %v290 = vpack.c.b16 %v282, %v281
    %299 = vmatprep.subr.bf16.mxu0 0
    %300 = vmatpush1.bf16.msra.mxu0 %v290
    %301 = vmatprep.subr.bf16.mxu0 0
    %302 = vmatpush1.bf16.msra.mxu0 %v289
    %303 = vmatprep.subr.bf16.mxu0 0
    %304 = vmatpush1.bf16.msra.mxu0 %v288
    %305 = vmatprep.subr.bf16.mxu0 0
    %306 = vmatpush1.bf16.msra.mxu0 %v287
    %307 = vmatprep.subr.bf16.mxu0 0
    %308 = vmatpush1.bf16.msra.mxu0 %v286
    %309 = vmatprep.subr.bf16.mxu0 0
    %310 = vmatpush1.bf16.msra.mxu0 %v285
    %311 = vmatprep.subr.bf16.mxu0 0
    %312 = vmatpush1.bf16.msra.mxu0 %v284
    %313 = vmatprep.subr.bf16.mxu0 0
    %314 = vmatpush1.bf16.msra.mxu0 %v283
    %315 = vmatprep.subr.bf16.mxu0 0
    %316 = vmatpush2.bf16.msra.mxu0 0
    %317 = vmatprep.subr.bf16.mxu0 0
    %318 = vmatpush2.bf16.msra.mxu0 0
    %319 = vmatprep.subr.bf16.mxu0 0
    %320 = vmatpush2.bf16.msra.mxu0 0
    %321 = vmatprep.subr.bf16.mxu0 0
    %322 = vmatpush2.bf16.msra.mxu0 0
    %323 = vmatprep.subr.bf16.mxu0 0
    %324 = vmatpush2.bf16.msra.mxu0 0
    %325 = vmatprep.subr.bf16.mxu0 0
    %326 = vmatpush2.bf16.msra.mxu0 0
    %327 = vmatprep.subr.bf16.mxu0 0
    %328 = vmatpush2.bf16.msra.mxu0 0
    %329 = vmatprep.subr.bf16.mxu0 0
    %330 = vmatpush2.bf16.msra.mxu0 0
    %331 = vmatprep.mubr.bf16.mxu0 0
    %332 = vmatmul.mubr.bf16.gmra.mxu0 %v246
    %v333 = vpop.f32.mrf.mxu0
    %v334 = vadd.f32 %v250, %v333
    %v335 = vpop.f32.mrf.mxu0
    %v336 = vpop.f32.mrf.mxu0
    %v337 = vadd.f32 %v250, %v336
    %v338 = vpop.f32.mrf.mxu0
    %339 = vdwg.mxu0
    %v340 = vtanh.pop %v334
    %v341 = vtanh.pop %v337
    %v342 = vlaneseq
    %v343 = vshrl.u32 %v342, 7
    %v344 = vsub.s32 3, %v343
    %v345 = vrot.slane %v55, %v344
    %v346 = vadd.f32 %v340, %v345
    %v347 = vadd.f32 %v341, %v345
    %348 = vst [vmem:[#allocation8] sm:$0xff] %v346
    %349 = vst [vmem:[#allocation8 + $0x8] sm:$0xff] %v347
    // Predicated region
    $region26: #{actor_forward.1} parent=1 // pred_check
      _
    $region27: #{actor_forward.1} parent=1 // pred_check_branch
      %351 = sbr.rel (0) target = $region29
    $region28: #{actor_forward.1} parent=1 // pred_region
      %s353 = ssub.s32 256, 256
      %354 = vsyncadd [#allocation4], %s353
      %s355 = sshll.u32 [#allocation8], 4
      %s356 = int_to_ptr.vmem [resolvable:$true] %s355
      %361 = dma.vmem_to_hbm [thread:$0]  %s356, 256, %s3, [#allocation4], 128, 128, 8
    $region29: #{actor_forward.1} parent=1 // pred_fallthru
      _
    // Predicated region
    $region30: #{actor_forward.1} parent=1 // pred_check
      _
    $region31: #{actor_forward.1} parent=1 // pred_check_branch
      %363 = sbr.rel (0) target = $region33
    $region32: #{actor_forward.1} parent=1 // pred_region
      %364 = dma.done [#allocation4], 256
    $region33: #{actor_forward.1} parent=1 // pred_fallthru
      _
    %365 = vsyncpa [#allocation3], 1
    %366 = vsyncpa [#allocation6], 1
    %367 = vsyncpa [#allocation4], 1

</llo_original>
